<compile_context>
chip_gen: v6e
topology: v6e:2x2x1
jax: 0.10.0
libtpu: 0.0.40
codegen_flags: <defaults>
</compile_context>

<pallas_src>
import functools

import jax
import jax.numpy as jnp
import numpy as np
from jax import lax
from jax.experimental import pallas as pl
from jax.experimental.pallas import tpu as pltpu


def _round_up(v, m):
    return -(-v // m) * m


def _largest_divisor_multiple(total, unit, limit):
    """Largest multiple of `unit` that divides `total` and is <= limit, else None."""
    if unit <= 0 or total % unit != 0 or limit < unit:
        return None
    best = None
    d = unit
    top = min(int(limit), total)
    while d <= top:
        if total % d == 0:
            best = d
        d += unit
    return best


def _vmem_capacity_bytes():
    try:
        cap = getattr(pltpu.get_tpu_info(), "vmem_capacity_bytes", None)
        if cap:
            return int(cap)
    except Exception:
        pass
    return 128 * 1024 * 1024          # v5e/v6e default


def _mbstd_partial_kernel(x_ref, o_ref, *, G, MF, L_blk, chunk, inv_G, eps):
    """Accumulate per-(m,f) partial sums of sqrt(var_over_group + eps) over the
    lane tiles owned by this split.  x_ref: (G, MF, L_blk); o_ref: (1, MF, 1)."""
    t = pl.program_id(1)

    @pl.when(t == 0)
    def _init():
        o_ref[...] = jnp.zeros_like(o_ref)

    def group_std_rowsum(off, width):
        # One vreg-resident lane chunk: fused sum / sum-of-squares over the
        # group axis, one-pass f32 variance, sqrt, lane-reduce -> (MF, 1).
        def slab(g):
            return x_ref[g, :, pl.ds(off, width)].astype(jnp.float32)   # (MF, width)

        y0 = slab(0)
        if G <= 8:                                   # small group: static unroll
            s1, s2 = y0, y0 * y0
            for g in range(1, G):
                yg = slab(g)
                s1 = s1 + yg
                s2 = s2 + yg * yg
        else:                                        # large group: rolled loop
            def g_body(g, carry):
                a1, a2 = carry
                yg = slab(g)
                return a1 + yg, a2 + yg * yg
            s1, s2 = lax.fori_loop(1, G, g_body, (y0, y0 * y0))

        mean = s1 * inv_G
        var = jnp.maximum(s2 * inv_G - mean * mean, 0.0)   # guard one-pass cancellation
        std = jnp.sqrt(var + eps)
        return jnp.sum(std, axis=-1, keepdims=True)        # (MF, 1)

    n_full = L_blk // chunk
    tail = L_blk - n_full * chunk

    row_sum = jnp.zeros((MF, 1), jnp.float32)
    if n_full > 0:
        if n_full <= 8:                              # few chunks: static offsets
            for ci in range(n_full):
                row_sum = row_sum + group_std_rowsum(ci * chunk, chunk)
        else:                                        # many chunks: rolled loop
            def chunk_body(ci, acc):
                off = pl.multiple_of(ci * chunk, chunk)
                return acc + group_std_rowsum(off, chunk)
            row_sum = lax.fori_loop(0, n_full, chunk_body, row_sum, unroll=2)
    if tail > 0:
        row_sum = row_sum + group_std_rowsum(n_full * chunk, tail)

    o_ref[...] += row_sum[None, :, :]


def minibatch_std_layer(x, group_size, num_channels=1, *, tile_lanes=None):
    """x: (N, C, H, W).  Returns (N, C + num_channels, H, W), matching the PyTorch module."""
    N, C, H, W = x.shape
    G = N if group_size is None else min(int(group_size), N)
    F = int(num_channels)
    assert N % G == 0, "N must be divisible by the group size"
    assert C % F == 0, "C must be divisible by num_channels"
    M = N // G
    c = C // F
    L = c * H * W                     # fused reduction (lane) axis per (m, f) row
    MF = M * F
    itemsize = np.dtype(x.dtype).itemsize

    # ---- generation-aware budgets ------------------------------------------
    vmem_cap = _vmem_capacity_bytes()
    small_vmem = vmem_cap <= 64 * 1024 * 1024        # v7x-class: 64 MiB per TC
    tile_budget = (12 if small_vmem else 16) * 1024 * 1024

    sub_mult = {4: 8, 2: 16, 1: 32}.get(itemsize, 8)  # dtype sublane packing
    mf_pad_vmem = _round_up(MF, sub_mult)             # padded rows of each VMEM slab
    mf_pad_vreg = _round_up(MF, 8)                    # f32 intermediates in vregs

    # Vreg-friendly in-kernel chunk width: keep s1/s2/y (3 x MF x chunk x 4B) resident.
    chunk = max(128, min(1024, 128 * (8192 // (mf_pad_vreg * 128))))

    bytes_per_lane = G * mf_pad_vmem * itemsize
    max_lanes = max(128, tile_budget // bytes_per_lane)

    if tile_lanes is not None:
        L_blk = int(tile_lanes)
        assert L % L_blk == 0 and (L_blk % 128 == 0 or L_blk == L)
    elif L <= max_lanes:
        # Whole axis fits in one tile.  Still split large arrays into >=~4 lane
        # tiles so the DMA of tile i+1 overlaps compute of tile i (and v7x's
        # two cores each get >=2 tiles).
        if L * bytes_per_lane >= 4 * 1024 * 1024:
            L_blk = (_largest_divisor_multiple(L, chunk, _round_up(max(L // 4, chunk), chunk))
                     or _largest_divisor_multiple(L, 128, max(128, L // 4))
                     or L)
        else:
            L_blk = L
    else:
        L_blk = (_largest_divisor_multiple(L, chunk, max_lanes)
                 or _largest_divisor_multiple(L, 128, max_lanes)
                 or L)                # last resort (only if L % 128 != 0): whole axis
    chunk = min(chunk, L_blk)

    block_bytes = G * mf_pad_vmem * L_blk * itemsize
    hard_cap = (48 if small_vmem else 100) * 1024 * 1024
    vmem_limit = max(32 * 1024 * 1024, min(2 * block_bytes + (4 << 20), hard_cap))

    T = L // L_blk
    splits = 2 if (T >= 2 and T % 2 == 0) else 1      # dual-TC split; ~free on 1-TC chips
    tps = T // splits

    # (N, C, H, W) -> (G, M*F, c*H*W): contiguous view; row r = m*F + f of group g.
    x3 = x.reshape(G, MF, L)

    kernel = functools.partial(
        _mbstd_partial_kernel, G=G, MF=MF, L_blk=L_blk, chunk=chunk,
        inv_G=float(1.0 / G), eps=1e-8)

    cost = pl.CostEstimate(
        flops=int(6 * N * C * H * W),
        transcendentals=int(M * C * H * W),
        bytes_accessed=int(N * C * H * W * itemsize + splits * MF * 4))

    partials = pl.pallas_call(
        kernel,
        out_shape=jax.ShapeDtypeStruct((splits, MF, 1), jnp.float32),
        grid_spec=pltpu.PrefetchScalarGridSpec(
            num_scalar_prefetch=0,
            grid=(splits, tps),
            in_specs=[pl.BlockSpec((G, MF, L_blk),
                                   lambda p, t: (0, 0, p * tps + t))],
            out_specs=pl.BlockSpec((1, MF, 1), lambda p, t: (p, 0, 0))),
        compiler_params=pltpu.CompilerParams(
            dimension_semantics=("parallel", "arbitrary"),
            vmem_limit_bytes=int(vmem_limit)),
        cost_estimate=cost,
    )(x3)                                             # (splits, MF, 1) f32 partial sums

    # Combine per-split partials, normalize, broadcast and concat in XLA
    # (pure bandwidth / layout work, deliberately kept out of the kernel).
    stats = (partials.sum(axis=0)[:, 0] * (1.0 / (c * H * W))).reshape(M, F)
    y = jnp.tile(stats, (G, 1)).astype(x.dtype)       # row n gets stats[n % M]
    y = jnp.broadcast_to(y[:, :, None, None], (N, F, H, W))
    return jnp.concatenate([x, y], axis=1)


def _reference(x, group_size, num_channels=1):
    # Pure-JAX transcription of the PyTorch forward, for verification.
    N, C, H, W = x.shape
    G = N if group_size is None else min(int(group_size), N)
    F = int(num_channels)
    c = C // F
    y = x.reshape(G, -1, F, c, H, W)
    y = y - jnp.mean(y, axis=0)
    y = jnp.mean(jnp.square(y), axis=0)
    y = jnp.sqrt(y + 1e-8)
    y = jnp.mean(y, axis=(2, 3, 4))
    y = y.reshape(-1, F, 1, 1)
    y = jnp.tile(y, (G, 1, H, W))
    return jnp.concatenate([x, y], axis=1)


if __name__ == "__main__":
    # Test 1: nominal small config (single lane tile, static group unroll).
    key = jax.random.PRNGKey(0)
    N, C, H, W = 2, 4, 16, 16
    x = jax.random.normal(key, (N, C, H, W), dtype=jnp.float32)
    out = jax.block_until_ready(minibatch_std_layer(x, group_size=2, num_channels=1))
    ref = _reference(x, 2, 1)
    assert out.shape == (N, C + 1, H, W), out.shape
    np.testing.assert_allclose(np.asarray(out), np.asarray(ref), rtol=1e-5, atol=2e-5)

    # Test 2: multi-tile pipelined grid with the dual-core split path
    # (splits=2, 2 lane tiles per split) and num_channels > 1.
    key2 = jax.random.PRNGKey(1)
    N2, C2, H2, W2 = 4, 16, 16, 16
    x2 = jax.random.normal(key2, (N2, C2, H2, W2), dtype=jnp.float32)
    out2 = jax.block_until_ready(
        minibatch_std_layer(x2, group_size=2, num_channels=2, tile_lanes=512))
    ref2 = _reference(x2, 2, 2)
    assert out2.shape == (N2, C2 + 2, H2, W2), out2.shape
    np.testing.assert_allclose(np.asarray(out2), np.asarray(ref2), rtol=1e-5, atol=2e-5)

    # Test 3: large group (G = 16 > 8 -> rolled fori_loop over the group axis)
    # with bf16 input (dtype-aware sublane accounting, f32 accumulation).
    key3 = jax.random.PRNGKey(2)
    N3, C3, H3, W3 = 16, 8, 8, 8
    xb = jax.random.normal(key3, (N3, C3, H3, W3), dtype=jnp.bfloat16)
    out3 = jax.block_until_ready(
        minibatch_std_layer(xb, group_size=None, num_channels=2))
    ref3 = _reference(xb.astype(jnp.float32), None, 2)
    assert out3.shape == (N3, C3 + 2, H3, W3), out3.shape
    np.testing.assert_allclose(np.asarray(out3.astype(jnp.float32)),
                               np.asarray(ref3), rtol=5e-2, atol=5e-2)

    print("KERNEL_OK")
</pallas_src>

<mosaic_0001>
module attributes {stable_mosaic.version = 11 : i64} {
  func.func @_mbstd_partial_kernel(%arg0: i32, %arg1: i32, %arg2: memref<2x1x1024xf32, #tpu.memory_space<vmem>>, %arg3: memref<1x1x1xf32, #tpu.memory_space<vmem>>) attributes {dimension_semantics = [#tpu.dimension_semantics<parallel>, #tpu.dimension_semantics<arbitrary>], iteration_bounds = array<i64: 1, 1>, scalar_prefetch = 0 : i64, scratch_operands = 0 : i64, tpu.core_type = #tpu.core_type<tc>, window_params = [{transform_indices = @transform_0, window_bounds = array<i64: 2, 1, 1024>}, {transform_indices = @transform_1, window_bounds = array<i64: 1, 1, 1>}]} {
    %c0_i32 = arith.constant 0 : i32
    %0 = arith.cmpi eq, %arg1, %c0_i32 : i32
    %1 = arith.extui %0 : i1 to i32
    %c0_i32_0 = arith.constant 0 : i32
    %2 = arith.cmpi ne, %1, %c0_i32_0 : i32
    scf.if %2 {
      %cst_16 = arith.constant 0.000000e+00 : f32
      %30 = vector.broadcast %cst_16 : f32 to vector<1x1x1xf32>
      %c0_17 = arith.constant 0 : index
      %c0_18 = arith.constant 0 : index
      %c0_19 = arith.constant 0 : index
      %31 = vector.load %arg3[%c0_17, %c0_18, %c0_19] : memref<1x1x1xf32, #tpu.memory_space<vmem>>, vector<1x1x1xf32>
      tpu.vector_store %arg3[%c0_17, %c0_18, %c0_19], %30 {strides = array<i32>} : memref<1x1x1xf32, #tpu.memory_space<vmem>>, vector<1x1x1xf32>,
    } else {
    }
    %cst = arith.constant 0.000000e+00 : f32
    %3 = vector.broadcast %cst : f32 to vector<1x1xf32>
    %c0 = arith.constant 0 : index
    %c0_1 = arith.constant 0 : index
    %c0_2 = arith.constant 0 : index
    %4 = vector.load %arg2[%c0, %c0_1, %c0_2] : memref<2x1x1024xf32, #tpu.memory_space<vmem>>, vector<1x1x1024xf32>
    %5 = vector.shape_cast %4 : vector<1x1x1024xf32> to vector<1x1024xf32>
    %6 = arith.mulf %5, %5 : vector<1x1024xf32>
    %c1 = arith.constant 1 : index
    %c0_3 = arith.constant 0 : index
    %c0_4 = arith.constant 0 : index
    %7 = vector.load %arg2[%c1, %c0_3, %c0_4] : memref<2x1x1024xf32, #tpu.memory_space<vmem>>, vector<1x1x1024xf32>
    %8 = vector.shape_cast %7 : vector<1x1x1024xf32> to vector<1x1024xf32>
    %9 = arith.addf %5, %8 : vector<1x1024xf32>
    %10 = arith.mulf %8, %8 : vector<1x1024xf32>
    %11 = arith.addf %6, %10 : vector<1x1024xf32>
    %cst_5 = arith.constant 5.000000e-01 : f32
    %12 = vector.broadcast %cst_5 : f32 to vector<1x1024xf32>
    %13 = arith.mulf %9, %12 : vector<1x1024xf32>
    %cst_6 = arith.constant 5.000000e-01 : f32
    %14 = vector.broadcast %cst_6 : f32 to vector<1x1024xf32>
    %15 = arith.mulf %11, %14 : vector<1x1024xf32>
    %16 = arith.mulf %13, %13 : vector<1x1024xf32>
    %17 = arith.subf %15, %16 : vector<1x1024xf32>
    %cst_7 = arith.constant 0.000000e+00 : f32
    %18 = vector.broadcast %cst_7 : f32 to vector<1x1024xf32>
    %19 = arith.maximumf %17, %18 : vector<1x1024xf32>
    %cst_8 = arith.constant 9.99999993E-9 : f32
    %20 = vector.broadcast %cst_8 : f32 to vector<1x1024xf32>
    %21 = arith.addf %19, %20 : vector<1x1024xf32>
    %22 = math.sqrt %21 : vector<1x1024xf32>
    %cst_9 = arith.constant dense<0.000000e+00> : vector<1xf32>
    %23 = vector.multi_reduction <add>, %22, %cst_9 [1] : vector<1x1024xf32> to vector<1xf32>
    %24 = vector.shape_cast %23 : vector<1xf32> to vector<1x1xf32>
    %25 = arith.addf %3, %24 : vector<1x1xf32>
    %c0_10 = arith.constant 0 : index
    %c0_11 = arith.constant 0 : index
    %c0_12 = arith.constant 0 : index
    %26 = vector.load %arg3[%c0_10, %c0_11, %c0_12] : memref<1x1x1xf32, #tpu.memory_space<vmem>>, vector<1x1x1xf32>
    %27 = vector.shape_cast %25 : vector<1x1xf32> to vector<1x1x1xf32>
    %28 = arith.addf %26, %27 : vector<1x1x1xf32>
    %c0_13 = arith.constant 0 : index
    %c0_14 = arith.constant 0 : index
    %c0_15 = arith.constant 0 : index
    %29 = vector.load %arg3[%c0_13, %c0_14, %c0_15] : memref<1x1x1xf32, #tpu.memory_space<vmem>>, vector<1x1x1xf32>
    tpu.vector_store %arg3[%c0_13, %c0_14, %c0_15], %28 {strides = array<i32>} : memref<1x1x1xf32, #tpu.memory_space<vmem>>, vector<1x1x1xf32>,
    return
  }
  func.func @transform_0(%arg0: i32, %arg1: i32) -> (i32, i32, i32) {
    %c1_i32 = arith.constant 1 : i32
    %0 = arith.muli %arg0, %c1_i32 : i32
    %1 = arith.addi %0, %arg1 : i32
    %c0_i32 = arith.constant 0 : i32
    %c0_i32_0 = arith.constant 0 : i32
    %c0_i32_1 = arith.constant 0 : i32
    return %c0_i32, %c0_i32_0, %1 : i32, i32, i32
  }
  func.func @transform_1(%arg0: i32, %arg1: i32) -> (i32, i32, i32) {
    %c0_i32 = arith.constant 0 : i32
    %c0_i32_0 = arith.constant 0 : i32
    %c0_i32_1 = arith.constant 0 : i32
    return %arg0, %c0_i32, %c0_i32_0 : i32, i32, i32
  }
}

</mosaic_0001>

<llo_original>
// kernel: tpu_custom_call.1
$region0: #{tpu_custom_call.1}
  #allocation0 [shape = 'u32[]', space=smem, size = 0x4, offset = 0x4, fixed_abs, tag = 'smem constant byte address 0x4 - core index']
  #allocation1 [shape = 'u32[144,128]{1,0:T(1,128)}', space=vmem, size = 0x12000, scoped, tag = 'internal scratch']
  %s0 = inlined_call_operand.hbm [shape: f32[2,1,1024], index: 0, kind: input, shape index: {}]
  %s1 = inlined_call_operand.hbm [shape: f32[1,1,1], index: 1, kind: output, shape index: {}]
  %s2 = sld [smem:[#allocation0]]
  $region22: #{tpu_custom_call.1} parent=0
    _
  %s4 = ssub.s32 1, %s2
  %s5 = scalar_select 0, %s4, %s2
  $region1: #{tpu_custom_call.1} parent=0
    #allocation2 [shape = 'u8[8192]{0}', space=vmem, size = 0x2000, scoped, tag = 'input window, operand 0, single buffered']
    #allocation3 [shape = 's32[1]{0}', space=sflag, size = 0x4, scoped, tag = 'scoped memory for tpu_custom_call.1']
    #allocation4 [shape = 's32[1]{0}', space=sflag, size = 0x4, scoped, tag = 'scoped memory for tpu_custom_call.1']
    #allocation5 [shape = 'u8[512]{0}', space=vmem, size = 0x400, scoped, tag = 'output window, operand 0, single buffered']
    %6 = vsyncpa [#allocation3], 0
    %7 = vsyncpa [#allocation4], 0
    // Predicated region
    $region2: #{tpu_custom_call.1} parent=1 // pred_check
      _
    $region3: #{tpu_custom_call.1} parent=1 // pred_check_branch
      %9 = sbr.rel (0) target = $region5
    $region4: #{tpu_custom_call.1} parent=1 // pred_region
      %s10 = sadd.s32 0, 0
      %s11 = smul.u32 8, %s10
      %s13 = ssub.s32 256, 256
      %14 = vsyncadd [#allocation3], %s13
      %s15 = smul.addr %s11, 16
      %s16 = scalar_lea.hbm %s0, %s15
      %s17 = sshll.u32 [#allocation2], 4
      %s18 = int_to_ptr.vmem [resolvable:$true] %s17
      %23 = dma.hbm_to_vmem [thread:$0]  %s16, 256, %s18, [#allocation3], 128, 128, 8
    $region5: #{tpu_custom_call.1} parent=1 // pred_fallthru
      _
    // Predicated region
    $region6: #{tpu_custom_call.1} parent=1 // pred_check
      _
    $region7: #{tpu_custom_call.1} parent=1 // pred_check_branch
      %25 = sbr.rel (0) target = $region9
    $region8: #{tpu_custom_call.1} parent=1 // pred_region
      %26 = dma.done [#allocation3], 256
    $region9: #{tpu_custom_call.1} parent=1 // pred_fallthru
      _
    %s27 = sadd.s32 0, 0
    %s28 = smul.u32 8, %s27
    %p29 = scmp.eq.s32.totalorder 0, 0
    // Predicated region
    $region10: #{tpu_custom_call.1} parent=1 // pred_check
      %p30 = pneg %p29
    $region11: #{tpu_custom_call.1} parent=1 // pred_check_branch
      %32 = sbr.rel (%p30) target = $region13
    $region12: #{tpu_custom_call.1} parent=1 // pred_region
      %vm33 = vcmask 0
      %34 = vst.msk [vmem:[#allocation5] sm:$0x1] %vm33, 0.0
    $region13: #{tpu_custom_call.1} parent=1 // pred_fallthru
      _
    %v35 = vld [vmem:[#allocation2] sm:$0xff]
    %v36 = vmul.f32 %v35, %v35
    %s37 = scalar_lea.vmem [#allocation2], 8
    %v38 = vld [vmem:[%s37] sm:$0xff]
    %v39 = vadd.f32 %v35, %v38
    %v40 = vmul.f32 %v38, %v38
    %v41 = vadd.f32 %v36, %v40
    %v42 = vmul.f32 %v39, 0.5
    %v43 = vmul.f32 %v41, 0.5
    %v44 = vmul.f32 %v42, %v42
    %v45 = vsub.f32 %v43, %v44
    %v46 = vmax.f32 %v45, 0.0
    %v47 = vadd.f32 %v46, 1e-08
    %v48 = vrsqrt.pop %v47
    %v49 = vmul.f32 %v47, %v48
    %vm50 = vcmp.eq.f32.partialorder %v47, inf
    %v51 = vsel %vm50, %v47, %v49
    %vm52 = vcmp.eq.f32.partialorder %v47, 0.0
    %v53 = vand.u32 %v47, 2147483648
    %v54 = vsel %vm52, %v53, %v51
    %v56 = vlaneseq
    %v57 = vshrl.u32 %v56, 7
    %v58 = vsub.s32 0, %v57
    %v59 = vrot.slane %v54, %v58
    %v60 = vlaneseq
    %v61 = vshrl.u32 %v60, 7
    %v62 = vsub.s32 1, %v61
    %v63 = vrot.slane %v54, %v62
    %v64 = vlaneseq
    %v65 = vshrl.u32 %v64, 7
    %v66 = vsub.s32 2, %v65
    %v67 = vrot.slane %v54, %v66
    %v68 = vlaneseq
    %v69 = vshrl.u32 %v68, 7
    %v70 = vsub.s32 3, %v69
    %v71 = vrot.slane %v54, %v70
    %v72 = vlaneseq
    %v73 = vshrl.u32 %v72, 7
    %v74 = vsub.s32 4, %v73
    %v75 = vrot.slane %v54, %v74
    %v76 = vlaneseq
    %v77 = vshrl.u32 %v76, 7
    %v78 = vsub.s32 5, %v77
    %v79 = vrot.slane %v54, %v78
    %v80 = vlaneseq
    %v81 = vshrl.u32 %v80, 7
    %v82 = vsub.s32 6, %v81
    %v83 = vrot.slane %v54, %v82
    %v84 = vlaneseq
    %v85 = vshrl.u32 %v84, 7
    %v86 = vsub.s32 7, %v85
    %v87 = vrot.slane %v54, %v86
    %vm96 = vcmask 1040384
    %v97 = vsel %vm96, %v59, 0.0
    %v98 = vsel %vm96, %v63, 0.0
    %v99 = vadd.f32 %v97, %v98
    %v100 = vsel %vm96, %v67, 0.0
    %v101 = vadd.f32 %v99, %v100
    %v102 = vsel %vm96, %v71, 0.0
    %v103 = vadd.f32 %v101, %v102
    %v104 = vsel %vm96, %v75, 0.0
    %v105 = vadd.f32 %v103, %v104
    %v106 = vsel %vm96, %v79, 0.0
    %v107 = vadd.f32 %v105, %v106
    %v108 = vsel %vm96, %v83, 0.0
    %v109 = vadd.f32 %v107, %v108
    %v110 = vsel %vm96, %v87, 0.0
    %v111 = vadd.f32 %v109, %v110
    %112 = vadd.xlane.f32.xlu0 %v111
    %v113 = vpop.xlane.xlu0 %112
    %v114 = vadd.f32 %v113, 0.0
    %v115 = vld [vmem:[#allocation5] sm:$0x1]
    %v116 = vadd.f32 %v115, %v114
    %vm117 = vcmask 0
    %118 = vst.msk [vmem:[#allocation5] sm:$0x1] %vm117, %v116
    // Predicated region
    $region14: #{tpu_custom_call.1} parent=1 // pred_check
      _
    $region15: #{tpu_custom_call.1} parent=1 // pred_check_branch
      %120 = sbr.rel (0) target = $region17
    $region16: #{tpu_custom_call.1} parent=1 // pred_region
      %s122 = ssub.s32 16, 16
      %123 = vsyncadd [#allocation4], %s122
      %s125 = sshll.u32 [#allocation5], 4
      %s126 = int_to_ptr.vmem [resolvable:$true] %s125
      %128 = dma.vmem_to_hbm [thread:$0]  %s126, 16, %s1, [#allocation4]
    $region17: #{tpu_custom_call.1} parent=1 // pred_fallthru
      _
    // Predicated region
    $region18: #{tpu_custom_call.1} parent=1 // pred_check
      _
    $region19: #{tpu_custom_call.1} parent=1 // pred_check_branch
      %130 = sbr.rel (0) target = $region21
    $region20: #{tpu_custom_call.1} parent=1 // pred_region
      %131 = dma.done [#allocation4], 16
    $region21: #{tpu_custom_call.1} parent=1 // pred_fallthru
      _
    %132 = vsyncpa [#allocation3], 1
    %133 = vsyncpa [#allocation4], 1

</llo_original>
